<compile_context>
chip_gen: v7x
topology: tpu7x:2x2x1
jax: 0.10.0
libtpu: 0.0.40
codegen_flags: <defaults>
</compile_context>

<pallas_src>
import math

import jax
import jax.numpy as jnp
from jax.experimental import pallas as pl
from jax.experimental.pallas import tpu as pltpu

_LANE = 128
_TINY_BYTES = 1 << 20          # below this many bytes of x, use the single-step path
_MIB = 1024 * 1024


def _build_position_table(embed_dim: int, max_len: int = 1000,
                          dtype=jnp.float32) -> jnp.ndarray:
    """Deterministic parameter setup, mirrors PositionEncoding.__init__ exactly."""
    if embed_dim % 2 != 0:
        # The reference module's 0::2 / 1::2 scatter requires an even embed_dim
        # (it would fail in PyTorch too); fail loudly instead of silently.
        raise ValueError(f"embed_dim must be even, got {embed_dim}")
    pos = jnp.arange(max_len, dtype=jnp.float32).reshape(-1, 1)          # (max_len, 1)
    top = jnp.arange(0, embed_dim, 2, dtype=jnp.float32) / embed_dim     # (D/2,)
    fm = jnp.power(10000.0, top)[None, :]                                # (1, D/2)
    X = pos / fm                                                         # (max_len, D/2)
    P = jnp.zeros((1, max_len, embed_dim), dtype=jnp.float32)
    P = P.at[:, :, 0::2].set(jnp.sin(X)[None])
    P = P.at[:, :, 1::2].set(jnp.cos(X)[None])
    return P.astype(dtype)


def _sublane_multiple(*dtypes) -> int:
    """Packed-sublane multiple: 8 for 32-bit, 16 for bf16, 32 for int8/fp8."""
    min_bytes = min(jnp.dtype(d).itemsize for d in dtypes)
    return max(8, 32 // max(1, min_bytes))


def _default_tile_bytes() -> int:
    """v5e is already >=95% of HBM roofline at 2 MiB tiles; v6e/v7x want ~4 MiB."""
    try:
        kind = jax.devices()[0].device_kind.lower()
    except Exception:  # pragma: no cover - defensive
        kind = ""
    if "v5" in kind:
        return 2 * _MIB
    return 4 * _MIB


def _pos_add_kernel(x_ref, p_ref, o_ref):
    # The dtype cast happens in-register here (VALU slack), keeping the P table
    # un-cast in HBM; the add is done in the promoted dtype (matches x+f32-buffer).
    o_ref[...] = (x_ref[...] + p_ref[...]).astype(o_ref.dtype)


def _small_pos_add(x: jnp.ndarray, p_slice: jnp.ndarray) -> jnp.ndarray:
    """Single-step path for KB-scale inputs: whole arrays in VMEM, no pipeline."""
    B, S, D = x.shape
    return pl.pallas_call(
        _pos_add_kernel,
        out_shape=jax.ShapeDtypeStruct((B, S, D), x.dtype),
        grid_spec=pltpu.PrefetchScalarGridSpec(
            num_scalar_prefetch=0,
            grid=(1,),
            in_specs=[
                pl.BlockSpec((B, S, D), lambda i: (0, 0, 0)),   # x (full)
                pl.BlockSpec((1, S, D), lambda i: (0, 0, 0)),   # P[:, :S] (full)
            ],
            out_specs=pl.BlockSpec((B, S, D), lambda i: (0, 0, 0)),
        ),
    )(x, p_slice)


def position_encoding(x: jnp.ndarray, P: jnp.ndarray,
                      *, tile_bytes: int | None = None) -> jnp.ndarray:
    """x: (B, S, D); P: (1, max_len, D). Returns x + P[:, :S] (broadcast over B)."""
    B, S, D = x.shape
    _, max_len, Dp = P.shape
    if Dp != D:
        raise ValueError(f"embed_dim mismatch: x has {D}, P has {Dp}")
    if S > max_len:
        raise ValueError(f"sequence length {S} exceeds max_len {max_len}")
    # NOTE: no P.astype(x.dtype) here — the cast happens per-block inside the kernel,
    # avoiding a full max_len x D read+write of the table in HBM every forward call.

    itemsize = jnp.dtype(x.dtype).itemsize

    # ---- Tiny-input fast path: one grid step, no tiling pipeline. ------------------
    if B * S * D * itemsize <= _TINY_BYTES:
        return _small_pos_add(x, P[:, :S, :])

    if tile_bytes is None:
        tile_bytes = _default_tile_bytes()

    # ---- Lane-dense 3-D views: x -> (B, R, 128), P -> (1, R_p, 128). ---------------
    if (S * D) % _LANE == 0:
        S_pad = S
        x_pad = x
        p_sliced = None
        p_full_view_ok = (max_len * D) % _LANE == 0
    else:
        # Pad S up so the lane-dense (rows, 128) path is taken instead of masked
        # C=D stores; at most 128/gcd(D,128) - 1 extra rows, sliced off afterwards.
        period = _LANE // math.gcd(D, _LANE)
        S_pad = ((S + period - 1) // period) * period
        x_pad = jnp.pad(x, ((0, 0), (0, S_pad - S), (0, 0)))
        p_sliced = P[:, :min(S_pad, max_len), :]
        if p_sliced.shape[1] < S_pad:
            p_sliced = jnp.pad(p_sliced, ((0, 0), (0, S_pad - p_sliced.shape[1]), (0, 0)))
        p_full_view_ok = False

    C = _LANE
    R = (S_pad * D) // C
    x3 = x_pad.reshape(B, R, C)

    # ---- Row tile: ~tile_bytes per block, dtype-aware sublane multiple. ------------
    sub = _sublane_multiple(x.dtype, P.dtype)
    target = max(sub, (tile_bytes // (C * itemsize)) // sub * sub)
    row_tile = R if R <= target else target
    num_tiles = pl.cdiv(R, row_tile)

    # Megacore (v7x): guarantee at least 2 grid steps so both TensorCores get work.
    while num_tiles * B < 2 and row_tile > sub:
        new_rt = max(sub, ((row_tile // 2) + sub - 1) // sub * sub)
        if new_rt >= row_tile:
            break
        row_tile = new_rt
        num_tiles = pl.cdiv(R, row_tile)

    # ---- P view.  Prefer the full, un-sliced table (free reshape view, no HBM copy);
    # slice to the first S_pad positions only when the block shape would otherwise be
    # illegal against P's larger row extent.
    if p_full_view_ok and row_tile % 8 == 0:
        p3 = P.reshape(1, (max_len * D) // C, C)
    else:
        if p_sliced is None:
            p_sliced = P[:, :S_pad, :]
        p3 = p_sliced.reshape(1, R, C)

    # 3 streams x 2 buffers x tile ~= 6*tile_bytes; leave headroom everywhere
    # (48 MiB <= v7x's 64 MiB physical; v5e scoped default is only 16 MiB so the
    # explicit value is load-bearing there).
    vmem_limit = 48 * _MIB if tile_bytes >= 4 * _MIB else 32 * _MIB

    # Grid ordered (row_tile, batch): the P block index is constant across the inner
    # batch loop, so Pallas re-DMAs P once per row tile, not once per step.
    out3 = pl.pallas_call(
        _pos_add_kernel,
        out_shape=jax.ShapeDtypeStruct((B, R, C), x.dtype),
        grid_spec=pltpu.PrefetchScalarGridSpec(
            num_scalar_prefetch=0,
            grid=(num_tiles, B),
            in_specs=[
                pl.BlockSpec((1, row_tile, C), lambda t, b: (b, t, 0)),   # x
                pl.BlockSpec((1, row_tile, C), lambda t, b: (0, t, 0)),   # P (reused over b)
            ],
            out_specs=pl.BlockSpec((1, row_tile, C), lambda t, b: (b, t, 0)),
        ),
        compiler_params=pltpu.CompilerParams(
            dimension_semantics=("parallel", "parallel"),
            vmem_limit_bytes=vmem_limit,
        ),
    )(x3, p3)

    out = out3.reshape(B, S_pad, D)
    if S_pad != S:
        out = out[:, :S, :]
    return out


if __name__ == "__main__":
    max_len = 1000
    key = jax.random.PRNGKey(0)

    # --- 1) Module-implied small shape (tiny-input single-step path). ---------------
    batch, seq, embed_dim = 2, 8, 32
    P32 = _build_position_table(embed_dim, max_len)
    x_small = jax.random.normal(key, (batch, seq, embed_dim), dtype=jnp.float32)
    out_small = jax.block_until_ready(position_encoding(x_small, P32))
    ref_small = x_small + P32[:, :seq, :]
    assert out_small.shape == (batch, seq, embed_dim)
    assert jnp.allclose(out_small, ref_small, atol=1e-6), "tiny-path mismatch"

    # --- 2) Larger shape exercising the tiled lane-dense pipeline. ------------------
    b2, s2, d2 = 2, 768, 256
    P256 = _build_position_table(d2, max_len)
    x_big = jax.random.normal(jax.random.PRNGKey(0), (b2, s2, d2), dtype=jnp.float32)
    out_big = jax.block_until_ready(position_encoding(x_big, P256))
    ref_big = x_big + P256[:, :s2, :]
    assert jnp.allclose(out_big, ref_big, atol=1e-6), "tiled-path mismatch"

    # --- 3) Shape where S*D % 128 != 0 exercising the pad-to-lane-dense fallback. ---
    b3, s3, d3 = 4, 900, 80
    P80 = _build_position_table(d3, max_len)
    x_odd = jax.random.normal(jax.random.PRNGKey(0), (b3, s3, d3), dtype=jnp.float32)
    out_odd = jax.block_until_ready(position_encoding(x_odd, P80))
    ref_odd = x_odd + P80[:, :s3, :]
    assert out_odd.shape == (b3, s3, d3)
    assert jnp.allclose(out_odd, ref_odd, atol=1e-6), "padded-path mismatch"

    print("KERNEL_OK")
</pallas_src>

<mosaic_0001>
module attributes {stable_mosaic.version = 11 : i64} {
  func.func @_pos_add_kernel(%arg0: i32, %arg1: memref<2x8x32xf32, #tpu.memory_space<vmem>>, %arg2: memref<1x8x32xf32, #tpu.memory_space<vmem>>, %arg3: memref<2x8x32xf32, #tpu.memory_space<vmem>>) attributes {dimension_semantics = [#tpu.dimension_semantics<arbitrary>], iteration_bounds = array<i64: 1>, scalar_prefetch = 0 : i64, scratch_operands = 0 : i64, tpu.core_type = #tpu.core_type<tc>, window_params = [{pipeline_mode = #tpu.pipeline_mode<synchronous>, transform_indices = @transform_0, window_bounds = array<i64: 2, 8, 32>}, {pipeline_mode = #tpu.pipeline_mode<synchronous>, transform_indices = @transform_1, window_bounds = array<i64: 1, 8, 32>}, {pipeline_mode = #tpu.pipeline_mode<synchronous>, transform_indices = @transform_2, window_bounds = array<i64: 2, 8, 32>}]} {
    %c0 = arith.constant 0 : index
    %c0_0 = arith.constant 0 : index
    %c0_1 = arith.constant 0 : index
    %0 = vector.load %arg1[%c0, %c0_0, %c0_1] : memref<2x8x32xf32, #tpu.memory_space<vmem>>, vector<2x8x32xf32>
    %c0_2 = arith.constant 0 : index
    %c0_3 = arith.constant 0 : index
    %c0_4 = arith.constant 0 : index
    %1 = vector.load %arg2[%c0_2, %c0_3, %c0_4] : memref<1x8x32xf32, #tpu.memory_space<vmem>>, vector<1x8x32xf32>
    %2 = vector.broadcast %1 : vector<1x8x32xf32> to vector<2x8x32xf32>
    %3 = arith.addf %0, %2 : vector<2x8x32xf32>
    %c0_5 = arith.constant 0 : index
    %c0_6 = arith.constant 0 : index
    %c0_7 = arith.constant 0 : index
    %4 = vector.load %arg3[%c0_5, %c0_6, %c0_7] : memref<2x8x32xf32, #tpu.memory_space<vmem>>, vector<2x8x32xf32>
    tpu.vector_store %arg3[%c0_5, %c0_6, %c0_7], %3 {strides = array<i32>} : memref<2x8x32xf32, #tpu.memory_space<vmem>>, vector<2x8x32xf32>,
    return
  }
  func.func @transform_0(%arg0: i32) -> (i32, i32, i32) {
    %c0_i32 = arith.constant 0 : i32
    %c0_i32_0 = arith.constant 0 : i32
    %c0_i32_1 = arith.constant 0 : i32
    %c0_i32_2 = arith.constant 0 : i32
    return %c0_i32, %c0_i32_0, %c0_i32_1 : i32, i32, i32
  }
  func.func @transform_1(%arg0: i32) -> (i32, i32, i32) {
    %c0_i32 = arith.constant 0 : i32
    %c0_i32_0 = arith.constant 0 : i32
    %c0_i32_1 = arith.constant 0 : i32
    %c0_i32_2 = arith.constant 0 : i32
    return %c0_i32, %c0_i32_0, %c0_i32_1 : i32, i32, i32
  }
  func.func @transform_2(%arg0: i32) -> (i32, i32, i32) {
    %c0_i32 = arith.constant 0 : i32
    %c0_i32_0 = arith.constant 0 : i32
    %c0_i32_1 = arith.constant 0 : i32
    %c0_i32_2 = arith.constant 0 : i32
    return %c0_i32, %c0_i32_0, %c0_i32_1 : i32, i32, i32
  }
}

</mosaic_0001>

<llo_original>
// kernel: tpu_custom_call.1
$region0: #{tpu_custom_call.1}
  #allocation0 [shape = 'u32[]', space=smem, size = 0x4, offset = 0x4, fixed_abs, tag = 'smem constant byte address 0x4 - core index']
  #allocation1 [shape = 'u32[144,128]{1,0:T(1,128)}', space=vmem, size = 0x12000, scoped, tag = 'internal scratch']
  %s0 = inlined_call_operand.hbm [shape: f32[2,8,32], index: 0, kind: input, shape index: {}]
  %s1 = inlined_call_operand.hbm [shape: f32[1,8,32], index: 1, kind: input, shape index: {}]
  %s2 = inlined_call_operand.hbm [shape: f32[2,8,32], index: 2, kind: output, shape index: {}]
  %s3 = sld [smem:[#allocation0]]
  $region26: #{tpu_custom_call.1} parent=0
    _
  %s5 = ssub.s32 1, %s3
  %s6 = scalar_select 0, %s5, %s3
  $region1: #{tpu_custom_call.1} parent=0
    #allocation2 [shape = 'u8[8192]{0}', space=vmem, size = 0x2000, scoped, tag = 'input window, operand 0, single buffered']
    #allocation3 [shape = 's32[1]{0}', space=sflag, size = 0x4, scoped, tag = 'scoped memory for tpu_custom_call.1']
    #allocation4 [shape = 's32[1]{0}', space=sflag, size = 0x4, scoped, tag = 'scoped memory for tpu_custom_call.1']
    #allocation5 [shape = 'u8[4096]{0}', space=vmem, size = 0x1000, scoped, tag = 'input window, operand 1, single buffered']
    #allocation6 [shape = 's32[1]{0}', space=sflag, size = 0x4, scoped, tag = 'scoped memory for tpu_custom_call.1']
    #allocation7 [shape = 'u8[8192]{0}', space=vmem, size = 0x2000, scoped, tag = 'output window, operand 0, single buffered']
    %7 = vsyncpa [#allocation3], 0
    %8 = vsyncpa [#allocation6], 0
    %9 = vsyncpa [#allocation4], 0
    // Predicated region
    $region2: #{tpu_custom_call.1} parent=1 // pred_check
      _
    $region3: #{tpu_custom_call.1} parent=1 // pred_check_branch
      %11 = sbr.rel (0) target = $region5
    $region4: #{tpu_custom_call.1} parent=1 // pred_region
      %s13 = ssub.s32 256, 256
      %14 = vsyncadd [#allocation3], %s13
      %s15 = sshll.u32 [#allocation2], 4
      %s16 = int_to_ptr.vmem [resolvable:$true] %s15
      %21 = dma.hbm_to_vmem [thread:$0]  %s0, 256, %s16, [#allocation3], 128, 128, 8
    $region5: #{tpu_custom_call.1} parent=1 // pred_fallthru
      _
    // Predicated region
    $region6: #{tpu_custom_call.1} parent=1 // pred_check
      _
    $region7: #{tpu_custom_call.1} parent=1 // pred_check_branch
      %23 = sbr.rel (0) target = $region9
    $region8: #{tpu_custom_call.1} parent=1 // pred_region
      %s25 = ssub.s32 128, 128
      %26 = vsyncadd [#allocation6], %s25
      %s28 = sshll.u32 [#allocation5], 4
      %s29 = int_to_ptr.vmem [resolvable:$true] %s28
      %31 = dma.hbm_to_vmem [thread:$0]  %s1, 128, %s29, [#allocation6]
    $region9: #{tpu_custom_call.1} parent=1 // pred_fallthru
      _
    // Predicated region
    $region10: #{tpu_custom_call.1} parent=1 // pred_check
      _
    $region11: #{tpu_custom_call.1} parent=1 // pred_check_branch
      %33 = sbr.rel (0) target = $region13
    $region12: #{tpu_custom_call.1} parent=1 // pred_region
      %34 = dma.done [#allocation3], 256
    $region13: #{tpu_custom_call.1} parent=1 // pred_fallthru
      _
    // Predicated region
    $region14: #{tpu_custom_call.1} parent=1 // pred_check
      _
    $region15: #{tpu_custom_call.1} parent=1 // pred_check_branch
      %36 = sbr.rel (0) target = $region17
    $region16: #{tpu_custom_call.1} parent=1 // pred_region
      %37 = dma.done [#allocation6], 128
    $region17: #{tpu_custom_call.1} parent=1 // pred_fallthru
      _
    %v38 = vld [vmem:[#allocation2] sm:$0xff]
    %v39 = vld [vmem:[#allocation2 + $0x8] sm:$0xff]
    %v40 = vld [vmem:[#allocation5] sm:$0xff]
    %v41 = vadd.f32 %v38, %v40
    %v42 = vadd.f32 %v39, %v40
    %vm43 = vcmask 261120
    %44 = vst.msk [vmem:[#allocation7] sm:$0xff] %vm43, %v41
    %45 = vst.msk [vmem:[#allocation7 + $0x8] sm:$0xff] %vm43, %v42
    // Predicated region
    $region18: #{tpu_custom_call.1} parent=1 // pred_check
      _
    $region19: #{tpu_custom_call.1} parent=1 // pred_check_branch
      %47 = sbr.rel (0) target = $region21
    $region20: #{tpu_custom_call.1} parent=1 // pred_region
      %s49 = ssub.s32 256, 256
      %50 = vsyncadd [#allocation4], %s49
      %s51 = sshll.u32 [#allocation7], 4
      %s52 = int_to_ptr.vmem [resolvable:$true] %s51
      %57 = dma.vmem_to_hbm [thread:$0]  %s52, 256, %s2, [#allocation4], 128, 128, 8
    $region21: #{tpu_custom_call.1} parent=1 // pred_fallthru
      _
    // Predicated region
    $region22: #{tpu_custom_call.1} parent=1 // pred_check
      _
    $region23: #{tpu_custom_call.1} parent=1 // pred_check_branch
      %59 = sbr.rel (0) target = $region25
    $region24: #{tpu_custom_call.1} parent=1 // pred_region
      %60 = dma.done [#allocation4], 256
    $region25: #{tpu_custom_call.1} parent=1 // pred_fallthru
      _
    %61 = vsyncpa [#allocation3], 1
    %62 = vsyncpa [#allocation6], 1
    %63 = vsyncpa [#allocation4], 1

</llo_original>
